<compile_context>
chip_gen: v7x
topology: tpu7x:2x2x1
jax: 0.10.0
libtpu: 0.0.40
codegen_flags: <defaults>
</compile_context>

<pallas_src>
import functools

import jax
import jax.numpy as jnp
from jax.experimental import pallas as pl
from jax.experimental.pallas import tpu as pltpu

_LANE = 128
_SUBLANE = 8


def _round_up(x: int, m: int) -> int:
    return (x + m - 1) // m * m


def _pad_to(a, rows: int, cols: int):
    """Zero-pad a 2-D array up to (rows, cols)."""
    r, c = a.shape
    if r == rows and c == cols:
        return a
    return jnp.pad(a, ((0, rows - r), (0, cols - c)))


def _critic_kernel(x_ref, w1_ref, b1_ref, w2_ref, b2_ref, wq_ref, bq_ref, q_ref):
    # One batch tile per grid step; weights/biases are VMEM-resident across steps.
    # MXU matmuls accumulate in f32; bias-add / ReLU epilogue stays f32.
    x = x_ref[...]
    h1 = jnp.dot(x, w1_ref[...], preferred_element_type=jnp.float32) + b1_ref[...]
    h1 = jnp.maximum(h1, 0.0)
    h2 = (
        jnp.dot(h1.astype(w2_ref.dtype), w2_ref[...], preferred_element_type=jnp.float32)
        + b2_ref[...]
    )
    h2 = jnp.maximum(h2, 0.0)
    q = (
        jnp.dot(h2.astype(wq_ref.dtype), wq_ref[...], preferred_element_type=jnp.float32)
        + bq_ref[...]
    )
    q_ref[...] = q.astype(q_ref.dtype)


@functools.partial(jax.jit, static_argnames=("block_batch", "compute_dtype"))
def critic_forward(x, w1, b1, w2, b2, wq, bq, *, block_batch=256,
                   compute_dtype=jnp.float32):
    """Critic MLP forward.

    x:  [batch, input_dims]        (f32)
    w*: [in_features, out_features] (pre-transposed for x @ W)
    b*: [1, out_features]
    Returns q: [batch, n_actions] (f32).
    """
    batch, din = x.shape
    h1_dim = w1.shape[1]
    h2_dim = w2.shape[1]
    nq = wq.shape[1]

    # --- Lane-dense padding of hidden/output dims (multiples of 128). ---
    h1p = _round_up(h1_dim, _LANE)
    h2p = _round_up(h2_dim, _LANE)
    nqp = _round_up(nq, _LANE)

    w1p = _pad_to(w1, din, h1p)
    b1p = _pad_to(b1, 1, h1p)
    w2p = _pad_to(w2, h1p, h2p)
    b2p = _pad_to(b2, 1, h2p)
    wqp = _pad_to(wq, h2p, nqp)
    bqp = _pad_to(bq, 1, nqp)

    # --- Batch tiling: TB multiple of 8, batch padded up to a multiple of TB. ---
    tb = min(int(block_batch), _round_up(batch, _SUBLANE))
    tb = _round_up(tb, _SUBLANE)
    batch_p = _round_up(batch, tb)
    xp = _pad_to(x, batch_p, din)

    # Optional bf16 matmul inputs (f32 accumulation kept in-kernel). Biases and
    # epilogue stay f32 (v5e has no bf16 VPU/EUP).
    if compute_dtype != jnp.float32:
        xp = xp.astype(compute_dtype)
        w1p = w1p.astype(compute_dtype)
        w2p = w2p.astype(compute_dtype)
        wqp = wqp.astype(compute_dtype)

    grid = (batch_p // tb,)

    in_specs = [
        # Streamed, batch-tiled observation tile.
        pl.BlockSpec((tb, din), lambda i: (i, 0)),
        # Weights/biases: constant index_map -> DMA'd once, stay VMEM-resident.
        pl.BlockSpec((din, h1p), lambda i: (0, 0)),
        pl.BlockSpec((1, h1p), lambda i: (0, 0)),
        pl.BlockSpec((h1p, h2p), lambda i: (0, 0)),
        pl.BlockSpec((1, h2p), lambda i: (0, 0)),
        pl.BlockSpec((h2p, nqp), lambda i: (0, 0)),
        pl.BlockSpec((1, nqp), lambda i: (0, 0)),
    ]
    out_specs = pl.BlockSpec((tb, nqp), lambda i: (i, 0))

    # --- VMEM budget: double-buffered x/q tiles + resident weights + scratch. ---
    xbytes = jnp.dtype(xp.dtype).itemsize
    wbytes = jnp.dtype(w1p.dtype).itemsize
    need = (
        2 * tb * din * xbytes          # double-buffered x tiles
        + 2 * tb * nqp * 4             # double-buffered q tiles (f32)
        + (din * h1p + h1p * h2p + h2p * nqp) * wbytes   # resident weights
        + (h1p + h2p + nqp) * 4        # biases (f32)
        + tb * (h1p + h2p) * 4         # h1/h2 intermediates
    )
    vmem_limit = min(64 << 20, max(8 << 20, 2 * need))

    q_padded = pl.pallas_call(
        _critic_kernel,
        out_shape=jax.ShapeDtypeStruct((batch_p, nqp), jnp.float32),
        grid=grid,
        in_specs=in_specs,
        out_specs=out_specs,
        compiler_params=pltpu.CompilerParams(
            dimension_semantics=("parallel",),   # shard batch tiles across TCs (v7x)
            vmem_limit_bytes=int(vmem_limit),
        ),
    )(xp, w1p, b1p, w2p, b2p, wqp, bqp)

    return q_padded[:batch, :nq]


def init_linear(key, fan_in, fan_out):
    """PyTorch nn.Linear default init: U(-1/sqrt(fan_in), 1/sqrt(fan_in)).

    Returns W with layout [fan_in, fan_out] (already transposed for x @ W),
    and bias with layout [1, fan_out].
    """
    kw, kb = jax.random.split(key)
    bound = 1.0 / jnp.sqrt(fan_in)
    w = jax.random.uniform(kw, (fan_in, fan_out), jnp.float32, -bound, bound)
    b = jax.random.uniform(kb, (1, fan_out), jnp.float32, -bound, bound)
    return w, b


def _jax_reference(x, w1, b1, w2, b2, wq, bq):
    h = jnp.maximum(x @ w1 + b1, 0.0)
    h = jnp.maximum(h @ w2 + b2, 0.0)
    return h @ wq + bq


if __name__ == "__main__":
    # Small shapes consistent with the module's Linear stack.
    batch = 2
    input_dims = 16
    fc1_dims = 32
    fc2_dims = 32
    n_actions = 4

    key = jax.random.PRNGKey(0)
    k_obs, k1, k2, k3, k_big = jax.random.split(key, 5)

    observation = jax.random.normal(k_obs, (batch, input_dims), jnp.float32)
    w1, b1 = init_linear(k1, input_dims, fc1_dims)
    w2, b2 = init_linear(k2, fc1_dims, fc2_dims)
    wq, bq = init_linear(k3, fc2_dims, n_actions)

    # Small-batch case (pads batch 2 -> 8, single grid step).
    q = critic_forward(observation, w1, b1, w2, b2, wq, bq)
    q = jax.block_until_ready(q)
    ref = _jax_reference(observation, w1, b1, w2, b2, wq, bq)
    assert q.shape == (batch, n_actions)
    assert jnp.allclose(q, ref, atol=1e-5), "mismatch vs JAX reference (small batch)"

    # Multi-tile case: batch not a multiple of the tile, several grid steps.
    big_batch = 50
    obs_big = jax.random.normal(k_big, (big_batch, input_dims), jnp.float32)
    q_big = critic_forward(obs_big, w1, b1, w2, b2, wq, bq, block_batch=16)
    q_big = jax.block_until_ready(q_big)
    ref_big = _jax_reference(obs_big, w1, b1, w2, b2, wq, bq)
    assert q_big.shape == (big_batch, n_actions)
    assert jnp.allclose(q_big, ref_big, atol=1e-5), "mismatch vs JAX reference (tiled batch)"

    print("KERNEL_OK")
</pallas_src>

<mosaic_0001>
module attributes {stable_mosaic.version = 11 : i64} {
  func.func @_critic_kernel(%arg0: i32, %arg1: memref<8x16xf32, #tpu.memory_space<vmem>>, %arg2: memref<16x128xf32, #tpu.memory_space<vmem>>, %arg3: memref<1x128xf32, #tpu.memory_space<vmem>>, %arg4: memref<128x128xf32, #tpu.memory_space<vmem>>, %arg5: memref<1x128xf32, #tpu.memory_space<vmem>>, %arg6: memref<128x128xf32, #tpu.memory_space<vmem>>, %arg7: memref<1x128xf32, #tpu.memory_space<vmem>>, %arg8: memref<8x128xf32, #tpu.memory_space<vmem>>) attributes {dimension_semantics = [#tpu.dimension_semantics<parallel>], iteration_bounds = array<i64: 1>, scalar_prefetch = 0 : i64, scratch_operands = 0 : i64, tpu.core_type = #tpu.core_type<tc>, window_params = [{transform_indices = @transform_0, window_bounds = array<i64: 8, 16>}, {pipeline_mode = #tpu.pipeline_mode<synchronous>, transform_indices = @transform_1, window_bounds = array<i64: 16, 128>}, {pipeline_mode = #tpu.pipeline_mode<synchronous>, transform_indices = @transform_2, window_bounds = array<i64: 1, 128>}, {pipeline_mode = #tpu.pipeline_mode<synchronous>, transform_indices = @transform_3, window_bounds = array<i64: 128, 128>}, {pipeline_mode = #tpu.pipeline_mode<synchronous>, transform_indices = @transform_4, window_bounds = array<i64: 1, 128>}, {pipeline_mode = #tpu.pipeline_mode<synchronous>, transform_indices = @transform_5, window_bounds = array<i64: 128, 128>}, {pipeline_mode = #tpu.pipeline_mode<synchronous>, transform_indices = @transform_6, window_bounds = array<i64: 1, 128>}, {transform_indices = @transform_7, window_bounds = array<i64: 8, 128>}]} {
    %c0 = arith.constant 0 : index
    %c0_0 = arith.constant 0 : index
    %0 = vector.load %arg1[%c0, %c0_0] : memref<8x16xf32, #tpu.memory_space<vmem>>, vector<8x16xf32>
    %c0_1 = arith.constant 0 : index
    %c0_2 = arith.constant 0 : index
    %1 = vector.load %arg2[%c0_1, %c0_2] : memref<16x128xf32, #tpu.memory_space<vmem>>, vector<16x128xf32>
    %cst = arith.constant dense<0.000000e+00> : vector<8x128xf32>
    %2 = tpu.matmul %0, %1, %cst {dimension_numbers = #tpu.dot_dimension_numbers<[1], [0], [0], [1], [0, 0, 1, 1], [], []>} : vector<8x16xf32>, vector<16x128xf32>, vector<8x128xf32> -> vector<8x128xf32>
    %c0_3 = arith.constant 0 : index
    %c0_4 = arith.constant 0 : index
    %3 = vector.load %arg3[%c0_3, %c0_4] : memref<1x128xf32, #tpu.memory_space<vmem>>, vector<1x128xf32>
    %4 = vector.broadcast %3 : vector<1x128xf32> to vector<8x128xf32>
    %5 = arith.addf %2, %4 : vector<8x128xf32>
    %cst_5 = arith.constant 0.000000e+00 : f32
    %6 = vector.broadcast %cst_5 : f32 to vector<8x128xf32>
    %7 = arith.maximumf %5, %6 : vector<8x128xf32>
    %c0_6 = arith.constant 0 : index
    %c0_7 = arith.constant 0 : index
    %8 = vector.load %arg4[%c0_6, %c0_7] : memref<128x128xf32, #tpu.memory_space<vmem>>, vector<128x128xf32>
    %cst_8 = arith.constant dense<0.000000e+00> : vector<8x128xf32>
    %9 = tpu.matmul %7, %8, %cst_8 {dimension_numbers = #tpu.dot_dimension_numbers<[1], [0], [0], [1], [0, 0, 1, 1], [], []>} : vector<8x128xf32>, vector<128x128xf32>, vector<8x128xf32> -> vector<8x128xf32>
    %c0_9 = arith.constant 0 : index
    %c0_10 = arith.constant 0 : index
    %10 = vector.load %arg5[%c0_9, %c0_10] : memref<1x128xf32, #tpu.memory_space<vmem>>, vector<1x128xf32>
    %11 = vector.broadcast %10 : vector<1x128xf32> to vector<8x128xf32>
    %12 = arith.addf %9, %11 : vector<8x128xf32>
    %cst_11 = arith.constant 0.000000e+00 : f32
    %13 = vector.broadcast %cst_11 : f32 to vector<8x128xf32>
    %14 = arith.maximumf %12, %13 : vector<8x128xf32>
    %c0_12 = arith.constant 0 : index
    %c0_13 = arith.constant 0 : index
    %15 = vector.load %arg6[%c0_12, %c0_13] : memref<128x128xf32, #tpu.memory_space<vmem>>, vector<128x128xf32>
    %cst_14 = arith.constant dense<0.000000e+00> : vector<8x128xf32>
    %16 = tpu.matmul %14, %15, %cst_14 {dimension_numbers = #tpu.dot_dimension_numbers<[1], [0], [0], [1], [0, 0, 1, 1], [], []>} : vector<8x128xf32>, vector<128x128xf32>, vector<8x128xf32> -> vector<8x128xf32>
    %c0_15 = arith.constant 0 : index
    %c0_16 = arith.constant 0 : index
    %17 = vector.load %arg7[%c0_15, %c0_16] : memref<1x128xf32, #tpu.memory_space<vmem>>, vector<1x128xf32>
    %18 = vector.broadcast %17 : vector<1x128xf32> to vector<8x128xf32>
    %19 = arith.addf %16, %18 : vector<8x128xf32>
    %c0_17 = arith.constant 0 : index
    %c0_18 = arith.constant 0 : index
    %20 = vector.load %arg8[%c0_17, %c0_18] : memref<8x128xf32, #tpu.memory_space<vmem>>, vector<8x128xf32>
    tpu.vector_store %arg8[%c0_17, %c0_18], %19 {strides = array<i32>} : memref<8x128xf32, #tpu.memory_space<vmem>>, vector<8x128xf32>,
    return
  }
  func.func @transform_0(%arg0: i32) -> (i32, i32) {
    %c0_i32 = arith.constant 0 : i32
    %c0_i32_0 = arith.constant 0 : i32
    return %arg0, %c0_i32 : i32, i32
  }
  func.func @transform_1(%arg0: i32) -> (i32, i32) {
    %c0_i32 = arith.constant 0 : i32
    %c0_i32_0 = arith.constant 0 : i32
    %c0_i32_1 = arith.constant 0 : i32
    return %c0_i32, %c0_i32_0 : i32, i32
  }
  func.func @transform_2(%arg0: i32) -> (i32, i32) {
    %c0_i32 = arith.constant 0 : i32
    %c0_i32_0 = arith.constant 0 : i32
    %c0_i32_1 = arith.constant 0 : i32
    return %c0_i32, %c0_i32_0 : i32, i32
  }
  func.func @transform_3(%arg0: i32) -> (i32, i32) {
    %c0_i32 = arith.constant 0 : i32
    %c0_i32_0 = arith.constant 0 : i32
    %c0_i32_1 = arith.constant 0 : i32
    return %c0_i32, %c0_i32_0 : i32, i32
  }
  func.func @transform_4(%arg0: i32) -> (i32, i32) {
    %c0_i32 = arith.constant 0 : i32
    %c0_i32_0 = arith.constant 0 : i32
    %c0_i32_1 = arith.constant 0 : i32
    return %c0_i32, %c0_i32_0 : i32, i32
  }
  func.func @transform_5(%arg0: i32) -> (i32, i32) {
    %c0_i32 = arith.constant 0 : i32
    %c0_i32_0 = arith.constant 0 : i32
    %c0_i32_1 = arith.constant 0 : i32
    return %c0_i32, %c0_i32_0 : i32, i32
  }
  func.func @transform_6(%arg0: i32) -> (i32, i32) {
    %c0_i32 = arith.constant 0 : i32
    %c0_i32_0 = arith.constant 0 : i32
    %c0_i32_1 = arith.constant 0 : i32
    return %c0_i32, %c0_i32_0 : i32, i32
  }
  func.func @transform_7(%arg0: i32) -> (i32, i32) {
    %c0_i32 = arith.constant 0 : i32
    %c0_i32_0 = arith.constant 0 : i32
    return %arg0, %c0_i32 : i32, i32
  }
}

</mosaic_0001>

<llo_original>
// kernel: critic_forward.1
$region0: #{critic_forward.1}
  #allocation0 [shape = 'u32[]', space=smem, size = 0x4, offset = 0x4, fixed_abs, tag = 'smem constant byte address 0x4 - core index']
  #allocation1 [shape = 'u32[144,128]{1,0:T(1,128)}', space=vmem, size = 0x12000, scoped, tag = 'internal scratch']
  %s0 = inlined_call_operand.vmem [shape: f32[8,16], index: 0, kind: input, shape index: {}]
  %s1 = inlined_call_operand.vmem [shape: f32[16,128], index: 1, kind: input, shape index: {}]
  %s2 = inlined_call_operand.vmem [shape: f32[1,128], index: 2, kind: input, shape index: {}]
  %s3 = inlined_call_operand.vmem [shape: f32[128,128], index: 3, kind: input, shape index: {}]
  %s4 = inlined_call_operand.vmem [shape: f32[1,128], index: 4, kind: input, shape index: {}]
  %s5 = inlined_call_operand.vmem [shape: f32[128,128], index: 5, kind: input, shape index: {}]
  %s6 = inlined_call_operand.vmem [shape: f32[1,128], index: 6, kind: input, shape index: {}]
  %s7 = inlined_call_operand.vmem [shape: f32[8,128], index: 7, kind: output, shape index: {}]
  %s8 = sld [smem:[#allocation0]]
  $region38: #{critic_forward.1} parent=0
    _
  %s10 = ssub.s32 1, %s8
  %s11 = scalar_select 0, %s10, %s8
  // Predicated region
  $region2: #{critic_forward.1} parent=0 // pred_check
    _
  $region3: #{critic_forward.1} parent=0 // pred_check_branch
    %13 = sbr.rel (0) target = $region5
  $region4: #{critic_forward.1} parent=0 // pred_region
    _
  $region5: #{critic_forward.1} parent=0 // pred_fallthru
    _
  // Predicated region
  $region6: #{critic_forward.1} parent=0 // pred_check
    _
  $region7: #{critic_forward.1} parent=0 // pred_check_branch
    %15 = sbr.rel (0) target = $region9
  $region8: #{critic_forward.1} parent=0 // pred_region
    _
  $region9: #{critic_forward.1} parent=0 // pred_fallthru
    _
  // Predicated region
  $region10: #{critic_forward.1} parent=0 // pred_check
    _
  $region11: #{critic_forward.1} parent=0 // pred_check_branch
    %17 = sbr.rel (0) target = $region13
  $region12: #{critic_forward.1} parent=0 // pred_region
    _
  $region13: #{critic_forward.1} parent=0 // pred_fallthru
    _
  // Predicated region
  $region14: #{critic_forward.1} parent=0 // pred_check
    _
  $region15: #{critic_forward.1} parent=0 // pred_check_branch
    %19 = sbr.rel (0) target = $region17
  $region16: #{critic_forward.1} parent=0 // pred_region
    _
  $region17: #{critic_forward.1} parent=0 // pred_fallthru
    _
  // Predicated region
  $region18: #{critic_forward.1} parent=0 // pred_check
    _
  $region19: #{critic_forward.1} parent=0 // pred_check_branch
    %21 = sbr.rel (0) target = $region21
  $region20: #{critic_forward.1} parent=0 // pred_region
    _
  $region21: #{critic_forward.1} parent=0 // pred_fallthru
    _
  // Predicated region
  $region22: #{critic_forward.1} parent=0 // pred_check
    _
  $region23: #{critic_forward.1} parent=0 // pred_check_branch
    %23 = sbr.rel (0) target = $region25
  $region24: #{critic_forward.1} parent=0 // pred_region
    _
  $region25: #{critic_forward.1} parent=0 // pred_fallthru
    _
  // Predicated region
  $region26: #{critic_forward.1} parent=0 // pred_check
    _
  $region27: #{critic_forward.1} parent=0 // pred_check_branch
    %25 = sbr.rel (0) target = $region29
  $region28: #{critic_forward.1} parent=0 // pred_region
    _
  $region29: #{critic_forward.1} parent=0 // pred_fallthru
    _
  %v26 = vld [vmem:[%s0] sm:$0xff]
  %v27 = vld [vmem:[%s1] sm:$0xff]
  %v28 = vld [vmem:[%s1 + $0x8] sm:$0xff]
  %v29 = vld [vmem:[%s2] sm:$0x1]
  %v31 = vlaneseq
  %v32 = vshrl.u32 %v31, 7
  %v33 = vsub.s32 0, %v32
  %v34 = vrot.slane %v29, %v33
  %vm36 = vcmask 130048
  %v38 = vsel %vm36, %v26, 0
  %40 = vmatprep.subr.mxu0 0.0
  %41 = vmatpush1.msra.mxu0 %v27
  %42 = vmatprep.subr.mxu0 0.0
  %43 = vmatpush1.msra.mxu0 %v28
  %44 = vmatprep.subr.mxu0 0.0
  %45 = vmatpush1.msra.mxu0 0.0
  %46 = vmatprep.subr.mxu0 0.0
  %47 = vmatpush1.msra.mxu0 0.0
  %48 = vmatprep.subr.mxu0 0.0
  %49 = vmatpush1.msra.mxu0 0.0
  %50 = vmatprep.subr.mxu0 0.0
  %51 = vmatpush1.msra.mxu0 0.0
  %52 = vmatprep.subr.mxu0 0.0
  %53 = vmatpush1.msra.mxu0 0.0
  %54 = vmatprep.subr.mxu0 0.0
  %55 = vmatpush1.msra.mxu0 0.0
  %56 = vmatprep.subr.mxu0 0.0
  %57 = vmatpush1.msra.mxu0 0.0
  %58 = vmatprep.subr.mxu0 0.0
  %59 = vmatpush1.msra.mxu0 0.0
  %60 = vmatprep.subr.mxu0 0.0
  %61 = vmatpush1.msra.mxu0 0.0
  %62 = vmatprep.subr.mxu0 0.0
  %63 = vmatpush1.msra.mxu0 0.0
  %64 = vmatprep.subr.mxu0 0.0
  %65 = vmatpush1.msra.mxu0 0.0
  %66 = vmatprep.subr.mxu0 0.0
  %67 = vmatpush1.msra.mxu0 0.0
  %68 = vmatprep.subr.mxu0 0.0
  %69 = vmatpush1.msra.mxu0 0.0
  %70 = vmatprep.subr.mxu0 0.0
  %71 = vmatpush1.msra.mxu0 0.0
  %72 = vmatprep.subr.mxu0 0.0
  %73 = vmatpush1.msra.mxu0 0.0
  %74 = vmatprep.subr.mxu0 0.0
  %75 = vmatpush1.msra.mxu0 0.0
  %76 = vmatprep.subr.mxu0 0.0
  %77 = vmatpush1.msra.mxu0 0.0
  %78 = vmatprep.subr.mxu0 0.0
  %79 = vmatpush1.msra.mxu0 0.0
  %80 = vmatprep.subr.mxu0 0.0
  %81 = vmatpush1.msra.mxu0 0.0
  %82 = vmatprep.subr.mxu0 0.0
  %83 = vmatpush1.msra.mxu0 0.0
  %84 = vmatprep.subr.mxu0 0.0
  %85 = vmatpush1.msra.mxu0 0.0
  %86 = vmatprep.subr.mxu0 0.0
  %87 = vmatpush1.msra.mxu0 0.0
  %88 = vmatprep.subr.mxu0 0.0
  %89 = vmatpush1.msra.mxu0 0.0
  %90 = vmatprep.subr.mxu0 0.0
  %91 = vmatpush1.msra.mxu0 0.0
  %92 = vmatprep.subr.mxu0 0.0
  %93 = vmatpush1.msra.mxu0 0.0
  %94 = vmatprep.subr.mxu0 0.0
  %95 = vmatpush1.msra.mxu0 0.0
  %96 = vmatprep.subr.mxu0 0.0
  %97 = vmatpush1.msra.mxu0 0.0
  %98 = vmatprep.subr.mxu0 0.0
  %99 = vmatpush1.msra.mxu0 0.0
  %100 = vmatprep.subr.mxu0 0.0
  %101 = vmatpush1.msra.mxu0 0.0
  %102 = vmatprep.subr.mxu0 0.0
  %103 = vmatpush1.msra.mxu0 0.0
  %104 = vmatprep.mubr.f32.mxu0 0.0
  %105 = vmatmul.mubr.f32.gmra.mrb[0].mxu0 %v38
  %v106 = vpop.f32.mrb[0].mxu0
  %v107 = vadd.f32 %v34, %v106
  %v108 = vpop.f32.mrb[0].mxu0
  %109 = vdwg.mxu0
  %v110 = vmax.f32 %v107, 0.0
  %v111 = vld [vmem:[%s3] sm:$0xff]
  %v112 = vld [vmem:[%s3 + $0x8] sm:$0xff]
  %v113 = vld [vmem:[%s3 + $0x10] sm:$0xff]
  %v114 = vld [vmem:[%s3 + $0x18] sm:$0xff]
  %v115 = vld [vmem:[%s3 + $0x20] sm:$0xff]
  %v116 = vld [vmem:[%s3 + $0x28] sm:$0xff]
  %v117 = vld [vmem:[%s3 + $0x30] sm:$0xff]
  %v118 = vld [vmem:[%s3 + $0x38] sm:$0xff]
  %v119 = vld [vmem:[%s3 + $0x40] sm:$0xff]
  %v120 = vld [vmem:[%s3 + $0x48] sm:$0xff]
  %v121 = vld [vmem:[%s3 + $0x50] sm:$0xff]
  %v122 = vld [vmem:[%s3 + $0x58] sm:$0xff]
  %v123 = vld [vmem:[%s3 + $0x60] sm:$0xff]
  %v124 = vld [vmem:[%s3 + $0x68] sm:$0xff]
  %v125 = vld [vmem:[%s3 + $0x70] sm:$0xff]
  %v126 = vld [vmem:[%s3 + $0x78] sm:$0xff]
  %v127 = vld [vmem:[%s4] sm:$0x1]
  %v129 = vlaneseq
  %v130 = vshrl.u32 %v129, 7
  %v131 = vsub.s32 0, %v130
  %v132 = vrot.slane %v127, %v131
  %134 = vmatprep.subr.mxu0 0.0
  %135 = vmatpush1.msra.mxu0 %v111
  %136 = vmatprep.subr.mxu0 0.0
  %137 = vmatpush1.msra.mxu0 %v112
  %138 = vmatprep.subr.mxu0 0.0
  %139 = vmatpush1.msra.mxu0 %v113
  %140 = vmatprep.subr.mxu0 0.0
  %141 = vmatpush1.msra.mxu0 %v114
  %142 = vmatprep.subr.mxu0 0.0
  %143 = vmatpush1.msra.mxu0 %v115
  %144 = vmatprep.subr.mxu0 0.0
  %145 = vmatpush1.msra.mxu0 %v116
  %146 = vmatprep.subr.mxu0 0.0
  %147 = vmatpush1.msra.mxu0 %v117
  %148 = vmatprep.subr.mxu0 0.0
  %149 = vmatpush1.msra.mxu0 %v118
  %150 = vmatprep.subr.mxu0 0.0
  %151 = vmatpush1.msra.mxu0 %v119
  %152 = vmatprep.subr.mxu0 0.0
  %153 = vmatpush1.msra.mxu0 %v120
  %154 = vmatprep.subr.mxu0 0.0
  %155 = vmatpush1.msra.mxu0 %v121
  %156 = vmatprep.subr.mxu0 0.0
  %157 = vmatpush1.msra.mxu0 %v122
  %158 = vmatprep.subr.mxu0 0.0
  %159 = vmatpush1.msra.mxu0 %v123
  %160 = vmatprep.subr.mxu0 0.0
  %161 = vmatpush1.msra.mxu0 %v124
  %162 = vmatprep.subr.mxu0 0.0
  %163 = vmatpush1.msra.mxu0 %v125
  %164 = vmatprep.subr.mxu0 0.0
  %165 = vmatpush1.msra.mxu0 %v126
  %166 = vmatprep.subr.mxu0 0.0
  %167 = vmatpush1.msra.mxu0 0.0
  %168 = vmatprep.subr.mxu0 0.0
  %169 = vmatpush1.msra.mxu0 0.0
  %170 = vmatprep.subr.mxu0 0.0
  %171 = vmatpush1.msra.mxu0 0.0
  %172 = vmatprep.subr.mxu0 0.0
  %173 = vmatpush1.msra.mxu0 0.0
  %174 = vmatprep.subr.mxu0 0.0
  %175 = vmatpush1.msra.mxu0 0.0
  %176 = vmatprep.subr.mxu0 0.0
  %177 = vmatpush1.msra.mxu0 0.0
  %178 = vmatprep.subr.mxu0 0.0
  %179 = vmatpush1.msra.mxu0 0.0
  %180 = vmatprep.subr.mxu0 0.0
  %181 = vmatpush1.msra.mxu0 0.0
  %182 = vmatprep.subr.mxu0 0.0
  %183 = vmatpush1.msra.mxu0 0.0
  %184 = vmatprep.subr.mxu0 0.0
  %185 = vmatpush1.msra.mxu0 0.0
  %186 = vmatprep.subr.mxu0 0.0
  %187 = vmatpush1.msra.mxu0 0.0
  %188 = vmatprep.subr.mxu0 0.0
  %189 = vmatpush1.msra.mxu0 0.0
  %190 = vmatprep.subr.mxu0 0.0
  %191 = vmatpush1.msra.mxu0 0.0
  %192 = vmatprep.subr.mxu0 0.0
  %193 = vmatpush1.msra.mxu0 0.0
  %194 = vmatprep.subr.mxu0 0.0
  %195 = vmatpush1.msra.mxu0 0.0
  %196 = vmatprep.subr.mxu0 0.0
  %197 = vmatpush1.msra.mxu0 0.0
  %198 = vmatprep.mubr.f32.mxu0 0.0
  %199 = vmatmul.mubr.f32.gmra.mrb[0].mxu0 %v110
  %v200 = vpop.f32.mrb[0].mxu0
  %v201 = vadd.f32 %v132, %v200
  %v202 = vpop.f32.mrb[0].mxu0
  %203 = vdwg.mxu0
  %v204 = vmax.f32 %v201, 0.0
  %v205 = vld [vmem:[%s5] sm:$0xff]
  %v206 = vld [vmem:[%s5 + $0x8] sm:$0xff]
  %v207 = vld [vmem:[%s5 + $0x10] sm:$0xff]
  %v208 = vld [vmem:[%s5 + $0x18] sm:$0xff]
  %v209 = vld [vmem:[%s5 + $0x20] sm:$0xff]
  %v210 = vld [vmem:[%s5 + $0x28] sm:$0xff]
  %v211 = vld [vmem:[%s5 + $0x30] sm:$0xff]
  %v212 = vld [vmem:[%s5 + $0x38] sm:$0xff]
  %v213 = vld [vmem:[%s5 + $0x40] sm:$0xff]
  %v214 = vld [vmem:[%s5 + $0x48] sm:$0xff]
  %v215 = vld [vmem:[%s5 + $0x50] sm:$0xff]
  %v216 = vld [vmem:[%s5 + $0x58] sm:$0xff]
  %v217 = vld [vmem:[%s5 + $0x60] sm:$0xff]
  %v218 = vld [vmem:[%s5 + $0x68] sm:$0xff]
  %v219 = vld [vmem:[%s5 + $0x70] sm:$0xff]
  %v220 = vld [vmem:[%s5 + $0x78] sm:$0xff]
  %v221 = vld [vmem:[%s6] sm:$0x1]
  %v223 = vlaneseq
  %v224 = vshrl.u32 %v223, 7
  %v225 = vsub.s32 0, %v224
  %v226 = vrot.slane %v221, %v225
  %228 = vmatprep.subr.mxu0 0.0
  %229 = vmatpush1.msra.mxu0 %v205
  %230 = vmatprep.subr.mxu0 0.0
  %231 = vmatpush1.msra.mxu0 %v206
  %232 = vmatprep.subr.mxu0 0.0
  %233 = vmatpush1.msra.mxu0 %v207
  %234 = vmatprep.subr.mxu0 0.0
  %235 = vmatpush1.msra.mxu0 %v208
  %236 = vmatprep.subr.mxu0 0.0
  %237 = vmatpush1.msra.mxu0 %v209
  %238 = vmatprep.subr.mxu0 0.0
  %239 = vmatpush1.msra.mxu0 %v210
  %240 = vmatprep.subr.mxu0 0.0
  %241 = vmatpush1.msra.mxu0 %v211
  %242 = vmatprep.subr.mxu0 0.0
  %243 = vmatpush1.msra.mxu0 %v212
  %244 = vmatprep.subr.mxu0 0.0
  %245 = vmatpush1.msra.mxu0 %v213
  %246 = vmatprep.subr.mxu0 0.0
  %247 = vmatpush1.msra.mxu0 %v214
  %248 = vmatprep.subr.mxu0 0.0
  %249 = vmatpush1.msra.mxu0 %v215
  %250 = vmatprep.subr.mxu0 0.0
  %251 = vmatpush1.msra.mxu0 %v216
  %252 = vmatprep.subr.mxu0 0.0
  %253 = vmatpush1.msra.mxu0 %v217
  %254 = vmatprep.subr.mxu0 0.0
  %255 = vmatpush1.msra.mxu0 %v218
  %256 = vmatprep.subr.mxu0 0.0
  %257 = vmatpush1.msra.mxu0 %v219
  %258 = vmatprep.subr.mxu0 0.0
  %259 = vmatpush1.msra.mxu0 %v220
  %260 = vmatprep.subr.mxu0 0.0
  %261 = vmatpush1.msra.mxu0 0.0
  %262 = vmatprep.subr.mxu0 0.0
  %263 = vmatpush1.msra.mxu0 0.0
  %264 = vmatprep.subr.mxu0 0.0
  %265 = vmatpush1.msra.mxu0 0.0
  %266 = vmatprep.subr.mxu0 0.0
  %267 = vmatpush1.msra.mxu0 0.0
  %268 = vmatprep.subr.mxu0 0.0
  %269 = vmatpush1.msra.mxu0 0.0
  %270 = vmatprep.subr.mxu0 0.0
  %271 = vmatpush1.msra.mxu0 0.0
  %272 = vmatprep.subr.mxu0 0.0
  %273 = vmatpush1.msra.mxu0 0.0
  %274 = vmatprep.subr.mxu0 0.0
  %275 = vmatpush1.msra.mxu0 0.0
  %276 = vmatprep.subr.mxu0 0.0
  %277 = vmatpush1.msra.mxu0 0.0
  %278 = vmatprep.subr.mxu0 0.0
  %279 = vmatpush1.msra.mxu0 0.0
  %280 = vmatprep.subr.mxu0 0.0
  %281 = vmatpush1.msra.mxu0 0.0
  %282 = vmatprep.subr.mxu0 0.0
  %283 = vmatpush1.msra.mxu0 0.0
  %284 = vmatprep.subr.mxu0 0.0
  %285 = vmatpush1.msra.mxu0 0.0
  %286 = vmatprep.subr.mxu0 0.0
  %287 = vmatpush1.msra.mxu0 0.0
  %288 = vmatprep.subr.mxu0 0.0
  %289 = vmatpush1.msra.mxu0 0.0
  %290 = vmatprep.subr.mxu0 0.0
  %291 = vmatpush1.msra.mxu0 0.0
  %292 = vmatprep.mubr.f32.mxu0 0.0
  %293 = vmatmul.mubr.f32.gmra.mrb[0].mxu0 %v204
  %v294 = vpop.f32.mrb[0].mxu0
  %v295 = vadd.f32 %v226, %v294
  %v296 = vpop.f32.mrb[0].mxu0
  %297 = vdwg.mxu0
  %298 = vst [vmem:[%s7] sm:$0xff] %v295
  // Predicated region
  $region30: #{critic_forward.1} parent=0 // pred_check
    _
  $region31: #{critic_forward.1} parent=0 // pred_check_branch
    %300 = sbr.rel (0) target = $region33
  $region32: #{critic_forward.1} parent=0 // pred_region
    _
  $region33: #{critic_forward.1} parent=0 // pred_fallthru
    _
  // Predicated region
  $region34: #{critic_forward.1} parent=0 // pred_check
    _
  $region35: #{critic_forward.1} parent=0 // pred_check_branch
    %302 = sbr.rel (0) target = $region37
  $region36: #{critic_forward.1} parent=0 // pred_region
    _
  $region37: #{critic_forward.1} parent=0 // pred_fallthru
    _

</llo_original>
